<compile_context>
chip_gen: v5e
topology: v5e:2x2
jax: 0.10.0
libtpu: 0.0.40
codegen_flags: <defaults>
</compile_context>

<pallas_src>
import functools

import jax
import jax.numpy as jnp
from jax.experimental import pallas as pl
from jax.experimental.pallas import tpu as pltpu


def _make_divisible(v, divisor=8, min_value=None):
    if min_value is None:
        min_value = divisor
    new_v = max(min_value, int(v + divisor / 2) // divisor * divisor)
    if new_v < 0.9 * v:
        new_v += divisor
    return new_v


# Conservative per-block VMEM byte budgets.  Blocks are double-buffered for
# both input and output, so the fused path's steady-state VMEM use is about
# 4 * _FUSED_IMAGE_BUDGET = 12 MiB -- under v5e's 16 MiB default scoped VMEM
# and well under v7x's 64 MiB physical VMEM.
_FUSED_IMAGE_BUDGET = 3 * 1024 * 1024      # full (C, HW) slab, fused path
_STREAM_BLOCK_BUDGET = 2 * 1024 * 1024     # (C, ts) block, two-pass fallback


def _gate_from_pooled(pooled, w1_ref, bn_scale_ref, bn_bias_ref, w2_ref, out_dtype):
    """pooled: (C, 1) f32 global average -> (C, 1) Hardsigmoid gate in out_dtype.

    Weights stay in their HBM/source dtype and are cast here, once per image.
    """
    h = jnp.dot(w1_ref[...].astype(jnp.float32), pooled,
                preferred_element_type=jnp.float32)                 # (E, 1)
    h = jnp.maximum(h * bn_scale_ref[...] + bn_bias_ref[...], 0.0)  # folded BN + ReLU
    t = jnp.dot(w2_ref[...].astype(jnp.float32), h,
                preferred_element_type=jnp.float32)                 # (C, 1)
    gate = jnp.clip(t + 3.0, 0.0, 6.0) * (1.0 / 6.0)                # Hardsigmoid
    return gate.astype(out_dtype)


# ---------------------------------------------------------------------------
# Fused single-pass kernel: pool + MLP + gate + multiply, one HBM read/write.
# ---------------------------------------------------------------------------
def se_fused_kernel(x_ref, w1_ref, bn_scale_ref, bn_bias_ref, w2_ref, o_ref,
                    *, inv_hw):
    # x_ref / o_ref: (1, C, HW) full image slab; weights are full-array blocks.
    x = x_ref[0]                                                    # (C, HW), native dtype
    pooled = jnp.sum(x.astype(jnp.float32), axis=1, keepdims=True) * inv_hw  # (C, 1)
    gate = _gate_from_pooled(pooled, w1_ref, bn_scale_ref, bn_bias_ref,
                             w2_ref, x.dtype)                       # (C, 1)
    o_ref[0] = x * gate                                             # native-dtype multiply


# ---------------------------------------------------------------------------
# Two-pass fallback (only for images too large to hold in VMEM at once).
# ---------------------------------------------------------------------------
def se_scale_kernel(x_ref, w1_ref, bn_scale_ref, bn_bias_ref, w2_ref,
                    gate_ref, sum_ref, *, inv_hw, hw, ts):
    s = pl.program_id(1)

    @pl.when(s == 0)
    def _init():
        sum_ref[...] = jnp.zeros_like(sum_ref)

    xt = x_ref[0].astype(jnp.float32)                               # (C, ts)
    if hw % ts != 0:
        # cdiv grid: mask the out-of-bounds lanes of the partial last tile.
        lane = jax.lax.broadcasted_iota(jnp.int32, xt.shape, 1)
        xt = jnp.where(s * ts + lane < hw, xt, 0.0)
    sum_ref[...] += jnp.sum(xt, axis=1, keepdims=True)              # (C, 1)

    @pl.when(s == pl.num_programs(1) - 1)
    def _finalize():
        pooled = sum_ref[...] * inv_hw
        # NOTE: (N, C, 1) gate is lane-sparse, but it is tiny and only exists
        # on this rarely-taken fallback path (the fused path has no gate store).
        gate_ref[0] = _gate_from_pooled(pooled, w1_ref, bn_scale_ref,
                                        bn_bias_ref, w2_ref, gate_ref.dtype)


def se_apply_kernel(x_ref, gate_ref, o_ref):
    # Native-dtype multiply; the f32 gate is cast down once per tile.
    o_ref[0] = x_ref[0] * gate_ref[0].astype(x_ref.dtype)


# ---------------------------------------------------------------------------
# Wrapper
# ---------------------------------------------------------------------------
def se_module(x_nchw, w1, gamma, beta, running_mean, running_var, w2, eps=1e-5,
              force_two_pass=False, spatial_tile=None):
    """SeModule forward. x_nchw: (N, C, H, W); w1: (E, C, 1, 1); w2: (C, E, 1, 1)."""
    N, C, H, W = x_nchw.shape
    E = w1.shape[0]
    HW = H * W
    itemsize = x_nchw.dtype.itemsize

    x = x_nchw.reshape(N, C, HW)                   # free row-major view

    # Fold eval-mode BatchNorm into per-channel scale/bias (tiny, E elements).
    inv_std = 1.0 / jnp.sqrt(running_var.astype(jnp.float32) + eps)
    g32 = gamma.astype(jnp.float32)
    bn_scale = (g32 * inv_std).reshape(E, 1)
    bn_bias = (beta.astype(jnp.float32)
               - running_mean.astype(jnp.float32) * g32 * inv_std).reshape(E, 1)

    # Keep the 1x1-conv weights in their source dtype; cast inside the
    # once-per-image gate epilogue instead of materializing f32 copies.
    w1_2d = w1.reshape(E, C)
    w2_2d = w2.reshape(C, E)

    x_bytes = int(x.size) * itemsize
    image_bytes = C * HW * itemsize
    use_fused = (not force_two_pass) and (image_bytes <= _FUSED_IMAGE_BUDGET)

    if use_fused:
        out = pl.pallas_call(
            functools.partial(se_fused_kernel, inv_hw=1.0 / HW),
            out_shape=jax.ShapeDtypeStruct((N, C, HW), x.dtype),
            grid_spec=pltpu.PrefetchScalarGridSpec(
                num_scalar_prefetch=0,
                grid=(N,),
                in_specs=[
                    pl.BlockSpec((1, C, HW), lambda n: (n, 0, 0)),
                    pl.BlockSpec((E, C), lambda n: (0, 0)),
                    pl.BlockSpec((E, 1), lambda n: (0, 0)),
                    pl.BlockSpec((E, 1), lambda n: (0, 0)),
                    pl.BlockSpec((C, E), lambda n: (0, 0)),
                ],
                out_specs=pl.BlockSpec((1, C, HW), lambda n: (n, 0, 0)),
            ),
            compiler_params=pltpu.CompilerParams(
                dimension_semantics=("parallel",)),
            cost_estimate=pl.CostEstimate(
                flops=N * (2 * C * HW + 4 * C * E),
                transcendentals=0,
                bytes_accessed=2 * x_bytes + 2 * C * E * w1.dtype.itemsize),
        )(x, w1_2d, bn_scale, bn_bias, w2_2d)
        return out.reshape(N, C, H, W)

    # ---- two-pass fallback: budget-sized spatial tiles, cdiv grid + masking ----
    if spatial_tile is not None:
        ts = spatial_tile
    else:
        max_lanes = max(128, (_STREAM_BLOCK_BUDGET // (C * itemsize)) // 128 * 128)
        ts = HW if HW <= max_lanes else max_lanes
    num_s = pl.cdiv(HW, ts)

    gate = pl.pallas_call(
        functools.partial(se_scale_kernel, inv_hw=1.0 / HW, hw=HW, ts=ts),
        out_shape=jax.ShapeDtypeStruct((N, C, 1), jnp.float32),
        grid_spec=pltpu.PrefetchScalarGridSpec(
            num_scalar_prefetch=0,
            grid=(N, num_s),
            in_specs=[
                pl.BlockSpec((1, C, ts), lambda n, s: (n, 0, s)),
                pl.BlockSpec((E, C), lambda n, s: (0, 0)),
                pl.BlockSpec((E, 1), lambda n, s: (0, 0)),
                pl.BlockSpec((E, 1), lambda n, s: (0, 0)),
                pl.BlockSpec((C, E), lambda n, s: (0, 0)),
            ],
            out_specs=pl.BlockSpec((1, C, 1), lambda n, s: (n, 0, 0)),
            scratch_shapes=[pltpu.VMEM((C, 1), jnp.float32)],
        ),
        compiler_params=pltpu.CompilerParams(
            dimension_semantics=("parallel", "arbitrary")),
        cost_estimate=pl.CostEstimate(
            flops=N * (C * HW + 4 * C * E),
            transcendentals=0,
            bytes_accessed=x_bytes + (2 * C * E + 2 * E) * 4 + N * C * 4),
    )(x, w1_2d, bn_scale, bn_bias, w2_2d)

    out = pl.pallas_call(
        se_apply_kernel,
        out_shape=jax.ShapeDtypeStruct((N, C, HW), x.dtype),
        grid_spec=pltpu.PrefetchScalarGridSpec(
            num_scalar_prefetch=0,
            grid=(N, num_s),
            in_specs=[
                pl.BlockSpec((1, C, ts), lambda n, s: (n, 0, s)),
                pl.BlockSpec((1, C, 1), lambda n, s: (n, 0, 0)),
            ],
            out_specs=pl.BlockSpec((1, C, ts), lambda n, s: (n, 0, s)),
        ),
        compiler_params=pltpu.CompilerParams(
            dimension_semantics=("parallel", "parallel")),
        cost_estimate=pl.CostEstimate(
            flops=N * C * HW,
            transcendentals=0,
            bytes_accessed=2 * x_bytes + N * C * 4),
    )(x, gate)

    return out.reshape(N, C, H, W)


def reference(x, w1, gamma, beta, running_mean, running_var, w2, eps=1e-5):
    N, C, H, W = x.shape
    E = w1.shape[0]
    pooled = jnp.mean(x, axis=(2, 3))                     # AdaptiveAvgPool2d(1)
    h = pooled @ w1.reshape(E, C).T                       # Conv2d(C->E, 1x1, no bias)
    h = (h - running_mean) / jnp.sqrt(running_var + eps) * gamma + beta
    h = jnp.maximum(h, 0.0)                               # ReLU
    s = h @ w2.reshape(C, E).T                            # Conv2d(E->C, 1x1, no bias)
    s = jnp.clip(s + 3.0, 0.0, 6.0) / 6.0                 # Hardsigmoid
    return x * s[:, :, None, None]


if __name__ == "__main__":
    key = jax.random.PRNGKey(0)
    k_x, k_w1, k_g, k_b, k_m, k_v, k_w2, k_x2 = jax.random.split(key, 8)

    N, C, H, W = 2, 16, 16, 16
    reduction = 4
    E = _make_divisible(C // reduction, 8)   # -> 8

    x = jax.random.normal(k_x, (N, C, H, W), jnp.float32)
    w1 = 0.3 * jax.random.normal(k_w1, (E, C, 1, 1), jnp.float32)
    gamma = 1.0 + 0.1 * jax.random.normal(k_g, (E,), jnp.float32)
    beta = 0.1 * jax.random.normal(k_b, (E,), jnp.float32)
    running_mean = 0.1 * jax.random.normal(k_m, (E,), jnp.float32)
    running_var = jnp.abs(jax.random.normal(k_v, (E,), jnp.float32)) + 0.5
    w2 = 0.3 * jax.random.normal(k_w2, (C, E, 1, 1), jnp.float32)

    # --- primary fused single-pass path ---
    out = jax.block_until_ready(
        se_module(x, w1, gamma, beta, running_mean, running_var, w2))
    ref = reference(x, w1, gamma, beta, running_mean, running_var, w2)
    assert out.shape == (N, C, H, W)
    assert jnp.allclose(out, ref, atol=1e-3, rtol=1e-3), "fused path mismatch"

    # --- two-pass fallback with cdiv grid + masked partial last spatial tile ---
    # HW = 144, ts = 128 -> 2 spatial tiles, second one partial (16 valid lanes).
    x2 = jax.random.normal(k_x2, (N, C, 12, 12), jnp.float32)
    out2 = jax.block_until_ready(
        se_module(x2, w1, gamma, beta, running_mean, running_var, w2,
                  force_two_pass=True, spatial_tile=128))
    ref2 = reference(x2, w1, gamma, beta, running_mean, running_var, w2)
    assert jnp.allclose(out2, ref2, atol=1e-3, rtol=1e-3), "two-pass path mismatch"

    print("KERNEL_OK")
</pallas_src>

<mosaic_0001>
module attributes {stable_mosaic.version = 11 : i64} {
  func.func @se_fused_kernel(%arg0: i32, %arg1: memref<1x16x256xf32, #tpu.memory_space<vmem>>, %arg2: memref<8x16xf32, #tpu.memory_space<vmem>>, %arg3: memref<8x1xf32, #tpu.memory_space<vmem>>, %arg4: memref<8x1xf32, #tpu.memory_space<vmem>>, %arg5: memref<16x8xf32, #tpu.memory_space<vmem>>, %arg6: memref<1x16x256xf32, #tpu.memory_space<vmem>>) attributes {dimension_semantics = [#tpu.dimension_semantics<parallel>], iteration_bounds = array<i64: 2>, scalar_prefetch = 0 : i64, scratch_operands = 0 : i64, tpu.core_type = #tpu.core_type<tc>, window_params = [{transform_indices = @transform_0, window_bounds = array<i64: 1, 16, 256>}, {pipeline_mode = #tpu.pipeline_mode<synchronous>, transform_indices = @transform_1, window_bounds = array<i64: 8, 16>}, {pipeline_mode = #tpu.pipeline_mode<synchronous>, transform_indices = @transform_2, window_bounds = array<i64: 8, 1>}, {pipeline_mode = #tpu.pipeline_mode<synchronous>, transform_indices = @transform_3, window_bounds = array<i64: 8, 1>}, {pipeline_mode = #tpu.pipeline_mode<synchronous>, transform_indices = @transform_4, window_bounds = array<i64: 16, 8>}, {transform_indices = @transform_5, window_bounds = array<i64: 1, 16, 256>}]} {
    %c0 = arith.constant 0 : index
    %c0_0 = arith.constant 0 : index
    %c0_1 = arith.constant 0 : index
    %0 = vector.load %arg1[%c0, %c0_0, %c0_1] : memref<1x16x256xf32, #tpu.memory_space<vmem>>, vector<1x16x256xf32>
    %1 = vector.shape_cast %0 : vector<1x16x256xf32> to vector<16x256xf32>
    %cst = arith.constant dense<0.000000e+00> : vector<16xf32>
    %2 = vector.multi_reduction <add>, %1, %cst [1] : vector<16x256xf32> to vector<16xf32>
    %3 = vector.shape_cast %2 : vector<16xf32> to vector<16x1xf32>
    %cst_2 = arith.constant 3.906250e-03 : f32
    %4 = vector.broadcast %cst_2 : f32 to vector<16x1xf32>
    %5 = arith.mulf %3, %4 : vector<16x1xf32>
    %c0_3 = arith.constant 0 : index
    %c0_4 = arith.constant 0 : index
    %6 = vector.load %arg2[%c0_3, %c0_4] : memref<8x16xf32, #tpu.memory_space<vmem>>, vector<8x16xf32>
    %cst_5 = arith.constant dense<0.000000e+00> : vector<8x1xf32>
    %7 = tpu.matmul %6, %5, %cst_5 {dimension_numbers = #tpu.dot_dimension_numbers<[1], [0], [0], [1], [0, 0, 1, 1], [], []>} : vector<8x16xf32>, vector<16x1xf32>, vector<8x1xf32> -> vector<8x1xf32>
    %c0_6 = arith.constant 0 : index
    %c0_7 = arith.constant 0 : index
    %8 = vector.load %arg3[%c0_6, %c0_7] : memref<8x1xf32, #tpu.memory_space<vmem>>, vector<8x1xf32>
    %9 = arith.mulf %7, %8 : vector<8x1xf32>
    %c0_8 = arith.constant 0 : index
    %c0_9 = arith.constant 0 : index
    %10 = vector.load %arg4[%c0_8, %c0_9] : memref<8x1xf32, #tpu.memory_space<vmem>>, vector<8x1xf32>
    %11 = arith.addf %9, %10 : vector<8x1xf32>
    %cst_10 = arith.constant 0.000000e+00 : f32
    %12 = vector.broadcast %cst_10 : f32 to vector<8x1xf32>
    %13 = arith.maximumf %11, %12 : vector<8x1xf32>
    %c0_11 = arith.constant 0 : index
    %c0_12 = arith.constant 0 : index
    %14 = vector.load %arg5[%c0_11, %c0_12] : memref<16x8xf32, #tpu.memory_space<vmem>>, vector<16x8xf32>
    %cst_13 = arith.constant dense<0.000000e+00> : vector<16x1xf32>
    %15 = tpu.matmul %14, %13, %cst_13 {dimension_numbers = #tpu.dot_dimension_numbers<[1], [0], [0], [1], [0, 0, 1, 1], [], []>} : vector<16x8xf32>, vector<8x1xf32>, vector<16x1xf32> -> vector<16x1xf32>
    %cst_14 = arith.constant 3.000000e+00 : f32
    %16 = vector.broadcast %cst_14 : f32 to vector<16x1xf32>
    %17 = arith.addf %15, %16 : vector<16x1xf32>
    %cst_15 = arith.constant 0.000000e+00 : f32
    %cst_16 = arith.constant 6.000000e+00 : f32
    %18 = vector.broadcast %cst_15 : f32 to vector<16x1xf32>
    %19 = arith.maximumf %18, %17 : vector<16x1xf32>
    %20 = vector.broadcast %cst_16 : f32 to vector<16x1xf32>
    %21 = arith.minimumf %20, %19 : vector<16x1xf32>
    %cst_17 = arith.constant 0.166666672 : f32
    %22 = vector.broadcast %cst_17 : f32 to vector<16x1xf32>
    %23 = arith.mulf %21, %22 : vector<16x1xf32>
    %24 = vector.broadcast %23 : vector<16x1xf32> to vector<16x256xf32>
    %25 = arith.mulf %1, %24 : vector<16x256xf32>
    %c0_18 = arith.constant 0 : index
    %c0_19 = arith.constant 0 : index
    %c0_20 = arith.constant 0 : index
    %26 = vector.load %arg6[%c0_18, %c0_19, %c0_20] : memref<1x16x256xf32, #tpu.memory_space<vmem>>, vector<1x16x256xf32>
    %27 = vector.shape_cast %26 : vector<1x16x256xf32> to vector<16x256xf32>
    %28 = vector.shape_cast %25 : vector<16x256xf32> to vector<1x16x256xf32>
    tpu.vector_store %arg6[%c0_18, %c0_19, %c0_20], %28 {strides = array<i32>} : memref<1x16x256xf32, #tpu.memory_space<vmem>>, vector<1x16x256xf32>,
    return
  }
  func.func @transform_0(%arg0: i32) -> (i32, i32, i32) {
    %c0_i32 = arith.constant 0 : i32
    %c0_i32_0 = arith.constant 0 : i32
    %c0_i32_1 = arith.constant 0 : i32
    return %arg0, %c0_i32, %c0_i32_0 : i32, i32, i32
  }
  func.func @transform_1(%arg0: i32) -> (i32, i32) {
    %c0_i32 = arith.constant 0 : i32
    %c0_i32_0 = arith.constant 0 : i32
    %c0_i32_1 = arith.constant 0 : i32
    return %c0_i32, %c0_i32_0 : i32, i32
  }
  func.func @transform_2(%arg0: i32) -> (i32, i32) {
    %c0_i32 = arith.constant 0 : i32
    %c0_i32_0 = arith.constant 0 : i32
    %c0_i32_1 = arith.constant 0 : i32
    return %c0_i32, %c0_i32_0 : i32, i32
  }
  func.func @transform_3(%arg0: i32) -> (i32, i32) {
    %c0_i32 = arith.constant 0 : i32
    %c0_i32_0 = arith.constant 0 : i32
    %c0_i32_1 = arith.constant 0 : i32
    return %c0_i32, %c0_i32_0 : i32, i32
  }
  func.func @transform_4(%arg0: i32) -> (i32, i32) {
    %c0_i32 = arith.constant 0 : i32
    %c0_i32_0 = arith.constant 0 : i32
    %c0_i32_1 = arith.constant 0 : i32
    return %c0_i32, %c0_i32_0 : i32, i32
  }
  func.func @transform_5(%arg0: i32) -> (i32, i32, i32) {
    %c0_i32 = arith.constant 0 : i32
    %c0_i32_0 = arith.constant 0 : i32
    %c0_i32_1 = arith.constant 0 : i32
    return %arg0, %c0_i32, %c0_i32_0 : i32, i32, i32
  }
}

</mosaic_0001>

<llo_original>
// kernel: tpu_custom_call.1
$region0: #{tpu_custom_call.1}
  #allocation0 [shape = 'u32[]', space=smem, size = 0x4, offset = 0x4, fixed_abs, tag = 'smem constant byte address 0x4 - core index']
  #allocation1 [shape = 'u32[72,128]{1,0:T(1,128)}', space=vmem, size = 0x9000, scoped, tag = 'internal scratch']
  %s0 = inlined_call_operand.hbm [shape: f32[2,16,256], index: 0, kind: input, shape index: {}]
  %s1 = inlined_call_operand.vmem [shape: f32[8,16], index: 1, kind: input, shape index: {}]
  %s2 = inlined_call_operand.vmem [shape: f32[8,1], index: 2, kind: input, shape index: {}]
  %s3 = inlined_call_operand.vmem [shape: f32[8,1], index: 3, kind: input, shape index: {}]
  %s4 = inlined_call_operand.vmem [shape: f32[16,8], index: 4, kind: input, shape index: {}]
  %s5 = inlined_call_operand.hbm [shape: f32[2,16,256], index: 5, kind: output, shape index: {}]
  %s6 = sld [smem:[#allocation0]]
  $region57: #{tpu_custom_call.1} parent=0
    _
  %s8 = ssub.s32 1, %s6
  %s9 = scalar_select 0, %s8, %s6
  $region1: #{tpu_custom_call.1} parent=0
    #allocation2 [shape = 'u8[32768]{0}', space=vmem, size = 0x8000, scoped, tag = 'input window, operand 0']
    #allocation3 [shape = 's32[2]{0}', space=sflag, size = 0x8, scoped, tag = 'scoped memory for tpu_custom_call.1']
    #allocation4 [shape = 's32[2]{0}', space=sflag, size = 0x8, scoped, tag = 'scoped memory for tpu_custom_call.1']
    #allocation5 [shape = 'u8[32768]{0}', space=vmem, size = 0x8000, scoped, tag = 'output window, operand 0']
    %10 = vsyncpa [#allocation3], 0
    %s11 = scalar_lea.sflag [#allocation3], 1
    %12 = vsyncpa %s11, 0
    %13 = vsyncpa [#allocation4], 0
    %s14 = scalar_lea.sflag [#allocation4], 1
    %15 = vsyncpa %s14, 0
    loop: start=0, step=1, limit=4
    $region2: #{tpu_custom_call.1} parent=1 // loop_pre_header
      _
    $region3: #{tpu_custom_call.1} parent=1 // loop_header
      %s17 = sphi 0, %s21
      %p18 = scmp.ge.s32.totalorder %s17, 4
      %s27 = sphi 0, %s29
      %s30 = sphi 0, %s27
      %s31 = sphi 0, %s30
      %s47 = sphi 0, %s31
      %s51 = sphi 0, %s51
      %s53 = sphi 0, %s51
      %s54 = sphi 0, %s53
      %s68 = sphi 0, %s54
      %s72 = sphi 0, %s72
      %s74 = sphi 0, %s72
      %s75 = sphi 0, %s74
      %s89 = sphi 0, %s75
      %s93 = sphi 0, %s93
      %s95 = sphi 0, %s93
      %s96 = sphi 0, %s95
      %s110 = sphi 0, %s96
      %s114 = sphi 0, %s114
      %s116 = sphi 0, %s114
      %s117 = sphi 0, %s116
      %s131 = sphi 0, %s117
      %s137 = sphi 0, %s139
      %s140 = sphi 0, %s137
      %s141 = sphi 0, %s140
      %s157 = sphi 0, %s141
    $region4: #{tpu_custom_call.1} parent=1 // loop_header_branch
      %20 = sbr.rel (%p18) target = $region8
    $region5: #{tpu_custom_call.1} parent=1 // loop_body
      %s22 = ssub.s32 %s17, 1
      %s23 = ssub.s32 %s17, 2
      %s24 = sadd.s32 %s17, 1
      %s25 = ssub.s32 %s17, %s24
      %p26 = scmp.eq.s32.totalorder %s25, 0
      %s28 = sadd.s32 %s27, 1
      %s29 = scalar_select %p26, %s27, %s28
      %p32 = pneg %p26
      %p33 = scmp.eq.s32.totalorder %s17, 1
      %p34 = por %p32, %p33
      %p35 = scmp.ne.s32.totalorder %s27, %s30
      %p36 = scmp.eq.s32.totalorder %s17, 0
      %p37 = por %p35, %p36
      %p38 = scmp.ne.s32.totalorder %s27, %s30
      %p39 = scmp.eq.s32.totalorder %s22, 1
      %p40 = por %p38, %p39
      %p41 = scmp.ne.s32.totalorder %s30, %s31
      %p42 = scmp.eq.s32.totalorder %s22, 0
      %p43 = por %p41, %p42
      %p44 = scmp.ne.s32.totalorder %s30, %s31
      %p45 = scmp.eq.s32.totalorder %s23, 1
      %p46 = por %p44, %p45
      %p48 = scmp.ne.s32.totalorder %s31, %s47
      %p49 = scmp.eq.s32.totalorder %s23, 0
      %p50 = por %p48, %p49
      %s52 = sadd.s32 %s51, 1
      %p55 = scmp.eq.s32.totalorder %s17, 1
      %p56 = scmp.ne.s32.totalorder %s51, %s53
      %p57 = scmp.eq.s32.totalorder %s17, 0
      %p58 = por %p56, %p57
      %p59 = scmp.ne.s32.totalorder %s51, %s53
      %p60 = scmp.eq.s32.totalorder %s22, 1
      %p61 = por %p59, %p60
      %p62 = scmp.ne.s32.totalorder %s53, %s54
      %p63 = scmp.eq.s32.totalorder %s22, 0
      %p64 = por %p62, %p63
      %p65 = scmp.ne.s32.totalorder %s53, %s54
      %p66 = scmp.eq.s32.totalorder %s23, 1
      %p67 = por %p65, %p66
      %p69 = scmp.ne.s32.totalorder %s54, %s68
      %p70 = scmp.eq.s32.totalorder %s23, 0
      %p71 = por %p69, %p70
      %s73 = sadd.s32 %s72, 1
      %p76 = scmp.eq.s32.totalorder %s17, 1
      %p77 = scmp.ne.s32.totalorder %s72, %s74
      %p78 = scmp.eq.s32.totalorder %s17, 0
      %p79 = por %p77, %p78
      %p80 = scmp.ne.s32.totalorder %s72, %s74
      %p81 = scmp.eq.s32.totalorder %s22, 1
      %p82 = por %p80, %p81
      %p83 = scmp.ne.s32.totalorder %s74, %s75
      %p84 = scmp.eq.s32.totalorder %s22, 0
      %p85 = por %p83, %p84
      %p86 = scmp.ne.s32.totalorder %s74, %s75
      %p87 = scmp.eq.s32.totalorder %s23, 1
      %p88 = por %p86, %p87
      %p90 = scmp.ne.s32.totalorder %s75, %s89
      %p91 = scmp.eq.s32.totalorder %s23, 0
      %p92 = por %p90, %p91
      %s94 = sadd.s32 %s93, 1
      %p97 = scmp.eq.s32.totalorder %s17, 1
      %p98 = scmp.ne.s32.totalorder %s93, %s95
      %p99 = scmp.eq.s32.totalorder %s17, 0
      %p100 = por %p98, %p99
      %p101 = scmp.ne.s32.totalorder %s93, %s95
      %p102 = scmp.eq.s32.totalorder %s22, 1
      %p103 = por %p101, %p102
      %p104 = scmp.ne.s32.totalorder %s95, %s96
      %p105 = scmp.eq.s32.totalorder %s22, 0
      %p106 = por %p104, %p105
      %p107 = scmp.ne.s32.totalorder %s95, %s96
      %p108 = scmp.eq.s32.totalorder %s23, 1
      %p109 = por %p107, %p108
      %p111 = scmp.ne.s32.totalorder %s96, %s110
      %p112 = scmp.eq.s32.totalorder %s23, 0
      %p113 = por %p111, %p112
      %s115 = sadd.s32 %s114, 1
      %p118 = scmp.eq.s32.totalorder %s17, 1
      %p119 = scmp.ne.s32.totalorder %s114, %s116
      %p120 = scmp.eq.s32.totalorder %s17, 0
      %p121 = por %p119, %p120
      %p122 = scmp.ne.s32.totalorder %s114, %s116
      %p123 = scmp.eq.s32.totalorder %s22, 1
      %p124 = por %p122, %p123
      %p125 = scmp.ne.s32.totalorder %s116, %s117
      %p126 = scmp.eq.s32.totalorder %s22, 0
      %p127 = por %p125, %p126
      %p128 = scmp.ne.s32.totalorder %s116, %s117
      %p129 = scmp.eq.s32.totalorder %s23, 1
      %p130 = por %p128, %p129
      %p132 = scmp.ne.s32.totalorder %s117, %s131
      %p133 = scmp.eq.s32.totalorder %s23, 0
      %p134 = por %p132, %p133
      %s135 = ssub.s32 %s17, %s24
      %p136 = scmp.eq.s32.totalorder %s135, 0
      %s138 = sadd.s32 %s137, 1
      %s139 = scalar_select %p136, %s137, %s138
      %p142 = pneg %p136
      %p143 = scmp.eq.s32.totalorder %s17, 1
      %p144 = por %p142, %p143
      %p145 = scmp.ne.s32.totalorder %s137, %s140
      %p146 = scmp.eq.s32.totalorder %s17, 0
      %p147 = por %p145, %p146
      %p148 = scmp.ne.s32.totalorder %s137, %s140
      %p149 = scmp.eq.s32.totalorder %s22, 1
      %p150 = por %p148, %p149
      %p151 = scmp.ne.s32.totalorder %s140, %s141
      %p152 = scmp.eq.s32.totalorder %s22, 0
      %p153 = por %p151, %p152
      %p154 = scmp.ne.s32.totalorder %s140, %s141
      %p155 = scmp.eq.s32.totalorder %s23, 1
      %p156 = por %p154, %p155
      %p158 = scmp.ne.s32.totalorder %s141, %s157
      %p159 = scmp.eq.s32.totalorder %s23, 0
      %p160 = por %p158, %p159
      %p161 = scmp.le.s32.totalorder 1, %s17
      %p162 = scmp.lt.s32.totalorder %s17, 3
      %p163 = pnand %p161, %p162
      %p164 = pneg %p163
      // Predicated region
      $region9: #{tpu_custom_call.1} parent=5 // pred_check
        _
      $region10: #{tpu_custom_call.1} parent=5 // pred_check_branch
        %166 = sbr.rel (%p163) target = $region12
      $region11: #{tpu_custom_call.1} parent=5 // pred_region
        %s167 = ssub.s32 %s17, 1
        // Predicated region
        $region13: #{tpu_custom_call.1} parent=11 // pred_check
          %p168 = pneg %p64
        $region14: #{tpu_custom_call.1} parent=11 // pred_check_branch
          %170 = sbr.rel (%p168) target = $region16
        $region15: #{tpu_custom_call.1} parent=11 // pred_region
          _
        $region16: #{tpu_custom_call.1} parent=11 // pred_fallthru
          _
        // Predicated region
        $region17: #{tpu_custom_call.1} parent=11 // pred_check
          %p171 = pneg %p85
        $region18: #{tpu_custom_call.1} parent=11 // pred_check_branch
          %173 = sbr.rel (%p171) target = $region20
        $region19: #{tpu_custom_call.1} parent=11 // pred_region
          _
        $region20: #{tpu_custom_call.1} parent=11 // pred_fallthru
          _
        // Predicated region
        $region21: #{tpu_custom_call.1} parent=11 // pred_check
          %p174 = pneg %p106
        $region22: #{tpu_custom_call.1} parent=11 // pred_check_branch
          %176 = sbr.rel (%p174) target = $region24
        $region23: #{tpu_custom_call.1} parent=11 // pred_region
          _
        $region24: #{tpu_custom_call.1} parent=11 // pred_fallthru
          _
        // Predicated region
        $region25: #{tpu_custom_call.1} parent=11 // pred_check
          %p177 = pneg %p127
        $region26: #{tpu_custom_call.1} parent=11 // pred_check_branch
          %179 = sbr.rel (%p177) target = $region28
        $region27: #{tpu_custom_call.1} parent=11 // pred_region
          _
        $region28: #{tpu_custom_call.1} parent=11 // pred_fallthru
          _
      $region12: #{tpu_custom_call.1} parent=5 // pred_fallthru
        _
      %p180 = scmp.lt.s32.totalorder %s17, 2
      // Predicated region
      $region29: #{tpu_custom_call.1} parent=5 // pred_check
        %p181 = pneg %p180
      $region30: #{tpu_custom_call.1} parent=5 // pred_check_branch
        %183 = sbr.rel (%p181) target = $region32
      $region31: #{tpu_custom_call.1} parent=5 // pred_region
        // Predicated region
        $region33: #{tpu_custom_call.1} parent=31 // pred_check
          %p184 = pneg %p37
        $region34: #{tpu_custom_call.1} parent=31 // pred_check_branch
          %186 = sbr.rel (%p184) target = $region36
        $region35: #{tpu_custom_call.1} parent=31 // pred_region
          %s187 = sand.u32 %s27, 1
          %s188 = scalar_lea.sflag [#allocation3], %s187
          %s189 = sand.u32 %s27, 1
          %s190 = smul.addr %s189, 32
          %s191 = scalar_lea.vmem [#allocation2], %s190
          %193 = vsyncadd %s188, 0
          %s194 = smul.addr %s17, 4
          %s195 = smul.addr %s194, 8
          %s196 = scalar_lea.hbm %s0, %s195
          %s197 = sshll.u32 %s196, 4
          %s198 = int_to_ptr.hbm [resolvable:$true] %s197
          %s199 = sshll.u32 %s191, 4
          %s200 = int_to_ptr.vmem [resolvable:$true] %s199
          %205 = dma.hbm_to_vmem [thread:$0]  %s198, 512, %s200, %s188, 256, 256, 16
        $region36: #{tpu_custom_call.1} parent=31 // pred_fallthru
          _
      $region32: #{tpu_custom_call.1} parent=5 // pred_fallthru
        _
      %p206 = scmp.le.s32.totalorder 1, %s17
      %p207 = scmp.lt.s32.totalorder %s17, 3
      %p208 = pnand %p206, %p207
      %p209 = pneg %p208
      // Predicated region
      $region37: #{tpu_custom_call.1} parent=5 // pred_check
        _
      $region38: #{tpu_custom_call.1} parent=5 // pred_check_branch
        %211 = sbr.rel (%p208) target = $region40
      $region39: #{tpu_custom_call.1} parent=5 // pred_region
        %s212 = ssub.s32 %s17, 1
        %s213 = sand.u32 %s30, 1
        %s214 = scalar_lea.sflag [#allocation3], %s213
        %s215 = sand.u32 %s30, 1
        %s216 = smul.addr %s215, 32
        %s217 = scalar_lea.vmem [#allocation2], %s216
        // Predicated region
        $region41: #{tpu_custom_call.1} parent=39 // pred_check
          %p218 = pneg %p43
        $region42: #{tpu_custom_call.1} parent=39 // pred_check_branch
          %220 = sbr.rel (%p218) target = $region44
        $region43: #{tpu_custom_call.1} parent=39 // pred_region
          %222 = dma.done %s214, 512
        $region44: #{tpu_custom_call.1} parent=39 // pred_fallthru
          _
        %s223 = sand.u32 %s30, 1
        %s224 = scalar_lea.sflag [#allocation3], %s223
        %s225 = sand.u32 %s30, 1
        %s226 = smul.addr %s225, 32
        %s227 = scalar_lea.vmem [#allocation2], %s226
        %p228 = pneg %p43
        %p229 = pneg %p40
        %p230 = pneg %p64
        %p231 = pneg %p61
        %p232 = pneg %p85
        %p233 = pneg %p82
        %p234 = pneg %p106
        %p235 = pneg %p103
        %p236 = pneg %p127
        %p237 = pneg %p124
        %p238 = pneg %p153
        %p239 = pneg %p150
        %s240 = sand.u32 %s140, 1
        %s241 = scalar_lea.sflag [#allocation4], %s240
        %s242 = sand.u32 %s140, 1
        %s243 = smul.addr %s242, 32
        %s244 = scalar_lea.vmem [#allocation5], %s243
        %v245 = vld [vmem:[%s217] sm:$0xff]
        %v246 = vld [vmem:[%s217 + $0x8] sm:$0xff]
        %v247 = vld [vmem:[%s217 + $0x10] sm:$0xff]
        %v248 = vld [vmem:[%s217 + $0x18] sm:$0xff]
        %v249 = vadd.f32 %v245, %v246
        %250 = vadd.xlane.f32.xlu0 %v249
        %v251 = vpop.xlane.xlu0 %250
        %v252 = vadd.f32 %v247, %v248
        %253 = vadd.xlane.f32.xlu0 %v252
        %v254 = vpop.xlane.xlu0 %253
        %v255 = vmul.f32 %v251, 0.00390625
        %v256 = vmul.f32 %v254, 0.00390625
        %v257 = vld [vmem:[%s1] sm:$0xff]
        %vm258 = vcmask 130048
        %v260 = vsel %vm258, %v257, 0
        %262 = vmatpush.msra.mxu0 0.0
        %263 = vmatpush.msra.mxu0 0.0
        %264 = vmatpush.msra.mxu0 0.0
        %265 = vmatpush.msra.mxu0 0.0
        %266 = vmatpush.msra.mxu0 0.0
        %267 = vmatpush.msra.mxu0 0.0
        %268 = vmatpush.msra.mxu0 0.0
        %269 = vmatpush.msra.mxu0 0.0
        %270 = vmatpush.msra.mxu0 0.0
        %271 = vmatpush.msra.mxu0 0.0
        %272 = vmatpush.msra.mxu0 0.0
        %273 = vmatpush.msra.mxu0 0.0
        %274 = vmatpush.msra.mxu0 0.0
        %275 = vmatpush.msra.mxu0 0.0
        %276 = vmatpush.msra.mxu0 %v256
        %277 = vmatpush.msra.mxu0 %v255
        %278 = vmatmul.f32.gmra.mxu0 %v260
        %v279 = vpop.f32.mrf.mxu0
        %v280 = vadd.f32 0.0, %v279
        %281 = vdwg.mxu0
        %v282 = vld [vmem:[%s2] sm:$0xff]
        %v283 = vmul.f32 %v280, %v282
        %v284 = vld [vmem:[%s3] sm:$0xff]
        %v285 = vadd.f32 %v283, %v284
        %v286 = vmax.f32 %v285, 0.0
        %v287 = vld [vmem:[%s4] sm:$0xff]
        %v288 = vld [vmem:[%s4 + $0x8] sm:$0xff]
        %vm289 = vcmask 64512
        %v291 = vsel %vm289, %v287, 0
        %v294 = vsel %vm289, %v288, 0
        %296 = vmatpush.msra.mxu0 0.0
        %297 = vmatpush.msra.mxu0 0.0
        %298 = vmatpush.msra.mxu0 0.0
        %299 = vmatpush.msra.mxu0 0.0
        %300 = vmatpush.msra.mxu0 0.0
        %301 = vmatpush.msra.mxu0 0.0
        %302 = vmatpush.msra.mxu0 0.0
        %303 = vmatpush.msra.mxu0 0.0
        %304 = vmatpush.msra.mxu0 0.0
        %305 = vmatpush.msra.mxu0 0.0
        %306 = vmatpush.msra.mxu0 0.0
        %307 = vmatpush.msra.mxu0 0.0
        %308 = vmatpush.msra.mxu0 0.0
        %309 = vmatpush.msra.mxu0 0.0
        %310 = vmatpush.msra.mxu0 0.0
        %311 = vmatpush.msra.mxu0 %v286
        %312 = vmatmul.f32.gmra.mxu0 %v291
        %v313 = vpop.f32.mrf.mxu0
        %v314 = vadd.f32 3.0, %v313
        %315 = vmatmul.f32.gmra.mxu0 %v294
        %v316 = vpop.f32.mrf.mxu0
        %v317 = vadd.f32 3.0, %v316
        %318 = vdwg.mxu0
        %v319 = vmax.f32 %v314, 0.0
        %v320 = vmax.f32 %v317, 0.0
        %v321 = vmin.f32 %v319, 6.0
        %v322 = vmin.f32 %v320, 6.0
        %v323 = vmul.f32 %v321, 0.16666667
        %v324 = vmul.f32 %v322, 0.16666667
        %326 = vset.pattern.permute.xlu0 0
        %327 = vperm.xlu0 %326, %v323
        %v328 = vpop.permute.xlu0 %327
        %331 = vset.pattern.permute.xlu0 0
        %332 = vperm.xlu0 %331, %v324
        %v333 = vpop.permute.xlu0 %332
        %v335 = vmul.f32 %v245, %v328
        %v336 = vmul.f32 %v246, %v328
        %v337 = vmul.f32 %v247, %v333
        %v338 = vmul.f32 %v248, %v333
        %339 = vst [vmem:[%s244] sm:$0xff] %v335
        %340 = vst [vmem:[%s244 + $0x8] sm:$0xff] %v336
        %341 = vst [vmem:[%s244 + $0x10] sm:$0xff] %v337
        %342 = vst [vmem:[%s244 + $0x18] sm:$0xff] %v338
        %s343 = sand.u32 %s140, 1
        %s344 = scalar_lea.sflag [#allocation4], %s343
        %s345 = sand.u32 %s140, 1
        %s346 = smul.addr %s345, 32
        %s347 = scalar_lea.vmem [#allocation5], %s346
        // Predicated region
        $region45: #{tpu_custom_call.1} parent=39 // pred_check
          %p348 = pneg %p150
        $region46: #{tpu_custom_call.1} parent=39 // pred_check_branch
          %350 = sbr.rel (%p348) target = $region48
        $region47: #{tpu_custom_call.1} parent=39 // pred_region
          %352 = vsyncadd %s344, 0
          %s353 = smul.addr %s22, 4
          %s354 = smul.addr %s353, 8
          %s355 = scalar_lea.hbm %s5, %s354
          %s356 = sshll.u32 %s347, 4
          %s357 = int_to_ptr.vmem [resolvable:$true] %s356
          %s358 = sshll.u32 %s355, 4
          %s359 = int_to_ptr.hbm [resolvable:$true] %s358
          %364 = dma.vmem_to_hbm [thread:$0]  %s357, 512, %s359, %s344, 256, 256, 16
        $region48: #{tpu_custom_call.1} parent=39 // pred_fallthru
          _
      $region40: #{tpu_custom_call.1} parent=5 // pred_fallthru
        _
      %p365 = scmp.le.s32.totalorder 2, %s17
      // Predicated region
      $region49: #{tpu_custom_call.1} parent=5 // pred_check
        %p366 = pneg %p365
      $region50: #{tpu_custom_call.1} parent=5 // pred_check_branch
        %368 = sbr.rel (%p366) target = $region52
      $region51: #{tpu_custom_call.1} parent=5 // pred_region
        %s369 = ssub.s32 %s17, 2
        // Predicated region
        $region53: #{tpu_custom_call.1} parent=51 // pred_check
          %p370 = pneg %p156
        $region54: #{tpu_custom_call.1} parent=51 // pred_check_branch
          %372 = sbr.rel (%p370) target = $region56
        $region55: #{tpu_custom_call.1} parent=51 // pred_region
          %s373 = sand.u32 %s141, 1
          %s374 = scalar_lea.sflag [#allocation4], %s373
          %s375 = sand.u32 %s141, 1
          %s376 = smul.addr %s375, 32
          %s377 = scalar_lea.vmem [#allocation5], %s376
          %379 = dma.done %s374, 512
        $region56: #{tpu_custom_call.1} parent=51 // pred_fallthru
          _
      $region52: #{tpu_custom_call.1} parent=5 // pred_fallthru
        _
    $region6: #{tpu_custom_call.1} parent=1 // loop_footer
      %s21 = sadd.s32 1, %s17
    $region7: #{tpu_custom_call.1} parent=1 // loop_footer_branch
      %16 = sbr.rel target = $region3
    $region8: #{tpu_custom_call.1} parent=1 // loop_exit
      _
    %380 = vsyncpa [#allocation3], 1
    %s381 = scalar_lea.sflag [#allocation3], 1
    %382 = vsyncpa %s381, 1
    %383 = vsyncpa [#allocation4], 1
    %s384 = scalar_lea.sflag [#allocation4], 1
    %385 = vsyncpa %s384, 1

</llo_original>
